<compile_context>
chip_gen: v7x
topology: tpu7x:2x2x1
jax: 0.10.0
libtpu: 0.0.40
codegen_flags: <defaults>
</compile_context>

<pallas_src>
import jax
import jax.numpy as jnp
from jax.experimental import pallas as pl
from jax.experimental.pallas import tpu as pltpu

# ----------------------------- configuration -------------------------------
L_3D = 4
L_VIEW = 2
VIEW_DEP = True
INPUT_3D_DIM = 3 + 6 * L_3D            # 27
INPUT_VIEW_DIM = 3 + 6 * L_VIEW        # 15
IN3_PAD = 32                           # 27 -> 32 (aligned K)
INV_PAD = 16                           # 15 -> 16 (aligned K)
IN_TOTAL = IN3_PAD + INV_PAD           # 48 streamed lanes per point
OUT_PACK = 4                           # packed output lanes: [rgb(3), density(1)]

LAYERS_FEAT_CFG = [None, 64, 64, 64, 64]     # cfg_model.mlp.layers_feat
SKIP = (2,)                                  # cfg_model.mlp.skip
LAYERS_RGB_CFG = [None, 32, 3]               # cfg_model.mlp.layers_rgb
HID_FEAT = LAYERS_FEAT_CFG[-1]               # 64
HID_RGB = LAYERS_RGB_CFG[1]                  # 32

TM_MAX = 2048                                # row tile upper bound (sweep 2048-4096)
VMEM_LIMIT_BYTES = 48 * 1024 * 1024          # explicit, fits v7x (64 MiB physical)

MXU_DTYPE = jnp.bfloat16                     # MXU input dtype (f32 accumulation)

# Weight-slab row offsets (all multiples of 16 for bf16 sublane tiling).
W0_OFF = 0                                   # (32, 64)  feat layer 0 (rows 27:32 zero)
W1_OFF = 32                                  # (64, 64)  feat layer 1
W2_OFF = 96                                  # (96, 64)  feat layer 2, rows [feat(64); x_enc(27); 0(5)]
W3_OFF = 192                                 # (64, 65)  feat layer 3, cols [hidden(64); density(1)]
RW0_OFF = 256                                # (80, 32)  rgb layer 0, rows [hidden(64); view_enc(15); 0(1)]
RW1_OFF = 336                                # (32, 3)   rgb layer 1
W_ROWS = 368
W_COLS = 128


def _round_up(x, m):
    return ((x + m - 1) // m) * m


def _built_layer_dims():
    """Reproduce NeRF.build_model dimension bookkeeping."""
    layers_feat = list(LAYERS_FEAT_CFG)
    layers_feat[0] = INPUT_3D_DIM
    layers_feat[-1] += 1                       # +1 channel for density
    layers_rgb = list(LAYERS_RGB_CFG)
    layers_rgb[0] = LAYERS_FEAT_CFG[-1] + (INPUT_VIEW_DIM if VIEW_DEP else 0)
    return layers_feat, layers_rgb


def _linear_in_out(layer_dims, skip):
    """(k_in, k_out) per linear, matching MLPwithSkipConnection."""
    pairs = []
    for li, (k_in, k_out) in enumerate(zip(layer_dims[:-1], layer_dims[1:])):
        if li in skip:
            k_in += layer_dims[0]
        pairs.append((k_in, k_out))
    return pairs


# ------------------------------ parameters ---------------------------------
def init_params(key):
    """Raw (PyTorch-layout) parameters: full concat shapes, f32."""
    layers_feat, layers_rgb = _built_layer_dims()
    feat_pairs = _linear_in_out(layers_feat, SKIP)
    rgb_pairs = _linear_in_out(layers_rgb, ())

    def make_mlp(key, pairs):
        ws, bs = [], []
        for li, (k_in, k_out) in enumerate(pairs):
            key, kw, kb = jax.random.split(key, 3)
            bound = 1.0 / jnp.sqrt(jnp.float32(k_in))
            w = jax.random.uniform(kw, (k_in, k_out), jnp.float32, -bound, bound)
            b = jax.random.uniform(kb, (1, k_out), jnp.float32, -bound, bound)
            if li == len(pairs) - 1:             # last-layer bias zeroed
                b = jnp.zeros_like(b)
            ws.append(w)
            bs.append(b)
        return key, ws, bs

    key, feat_w, feat_b = make_mlp(key, feat_pairs)
    key, rgb_w, rgb_b = make_mlp(key, rgb_pairs)
    return feat_w, feat_b, rgb_w, rgb_b


def pack_params(params):
    """Pack all weights into one bf16 slab and all biases into one f32 slab.

    Row/column order of each block preserves the torch.cat([feat, encoding])
    order used by MLPwithSkipConnection / get_color; zero rows match the
    zero-padded encoding lanes of the streamed input.
    """
    fw, fb, rw, rb = params

    W = jnp.zeros((W_ROWS, W_COLS), jnp.float32)

    def put(W, r0, w):
        return W.at[r0:r0 + w.shape[0], 0:w.shape[1]].set(w)

    W = put(W, W0_OFF, fw[0])                             # (27, 64)
    W = put(W, W1_OFF, fw[1])                             # (64, 64)
    W = put(W, W2_OFF, fw[2][:HID_FEAT])                  # (64, 64)  feat rows
    W = put(W, W2_OFF + HID_FEAT, fw[2][HID_FEAT:])       # (27, 64)  x_enc rows
    fw3_reord = jnp.concatenate([fw[3][:, 1:], fw[3][:, 0:1]], axis=-1)   # [hidden | density]
    W = put(W, W3_OFF, fw3_reord)                         # (64, 65)
    W = put(W, RW0_OFF, rw[0][:HID_FEAT])                 # (64, 32)  hidden rows
    W = put(W, RW0_OFF + HID_FEAT, rw[0][HID_FEAT:])      # (15, 32)  view_enc rows
    W = put(W, RW1_OFF, rw[1])                            # (32, 3)
    w_slab = W.astype(MXU_DTYPE)

    B = jnp.zeros((8, W_COLS), jnp.float32)
    B = B.at[0:1, 0:HID_FEAT].set(fb[0])
    B = B.at[1:2, 0:HID_FEAT].set(fb[1])
    B = B.at[2:3, 0:HID_FEAT].set(fb[2])
    fb3_reord = jnp.concatenate([fb[3][:, 1:], fb[3][:, 0:1]], axis=-1)
    B = B.at[3:4, 0:HID_FEAT + 1].set(fb3_reord)
    B = B.at[4:5, 0:HID_RGB].set(rb[0])
    B = B.at[5:6, 0:3].set(rb[1])
    return w_slab, B


# ------------------------------ JAX glue ------------------------------------
def positional_encoding(x, num_freq_bases):
    """nerf_util.positional_encoding: [..., C] -> [..., 2*C*L]."""
    freqs = (2.0 ** jnp.arange(num_freq_bases, dtype=jnp.float32)) * jnp.pi
    spectrum = x[..., None] * freqs                                   # [..., C, L]
    enc = jnp.stack([jnp.sin(spectrum), jnp.cos(spectrum)], axis=-2)  # [..., C, 2, L]
    return enc.reshape(*x.shape[:-1], -1)


def encode_3d(points_3d):
    enc = positional_encoding(points_3d, L_3D)
    return jnp.concatenate([points_3d, enc], axis=-1)


def encode_view(ray_unit):
    enc = positional_encoding(ray_unit, L_VIEW)
    return jnp.concatenate([ray_unit, enc], axis=-1)


# TODO(synk): if xprof shows the kernel is HBM-bound (v5e), fuse the positional
# encoding into the kernel and stream only raw (N, 8) [xyz, ray_unit, pad].


# ------------------------------ Pallas kernel -------------------------------
def _softplus(x):
    # numerically stable softplus (density_activ), f32 on the VPU/EUP
    return jnp.maximum(x, 0.0) + jnp.log1p(jnp.exp(-jnp.abs(x)))


def _sigmoid(x):
    return 1.0 / (1.0 + jnp.exp(-x))


def _nerf_kernel(in_ref, w_ref, b_ref, out_ref):
    f32 = jnp.float32

    # streamed bf16 input: lanes [x_enc(27), 0(5), view_enc(15), 0(1)]
    xb = in_ref[:, 0:IN3_PAD]                       # (TM, 32) bf16
    vb = in_ref[:, IN3_PAD:IN_TOTAL]                # (TM, 16) bf16

    # --- feat MLP: dims [32, 64, 64, 64(+skip 32), 64+1] with skip at layer 2 ---
    f = jnp.dot(xb, w_ref[W0_OFF:W0_OFF + IN3_PAD, 0:HID_FEAT],
                preferred_element_type=f32) + b_ref[0:1, 0:HID_FEAT]
    f = jnp.maximum(f, 0.0)

    f = jnp.dot(f.astype(MXU_DTYPE), w_ref[W1_OFF:W1_OFF + HID_FEAT, 0:HID_FEAT],
                preferred_element_type=f32) + b_ref[1:2, 0:HID_FEAT]
    f = jnp.maximum(f, 0.0)

    # skip connection: cat([feat, x_enc]) @ W as ONE K=96 matmul
    cat_skip = jnp.concatenate([f.astype(MXU_DTYPE), xb], axis=-1)        # (TM, 96)
    f = jnp.dot(cat_skip, w_ref[W2_OFF:W2_OFF + HID_FEAT + IN3_PAD, 0:HID_FEAT],
                preferred_element_type=f32) + b_ref[2:3, 0:HID_FEAT]
    f = jnp.maximum(f, 0.0)

    # last feat layer: 65 output cols, reordered as [hidden(64), density(1)]
    out3 = jnp.dot(f.astype(MXU_DTYPE), w_ref[W3_OFF:W3_OFF + HID_FEAT, 0:HID_FEAT + 1],
                   preferred_element_type=f32) + b_ref[3:4, 0:HID_FEAT + 1]
    hidden = jnp.maximum(out3[:, 0:HID_FEAT], 0.0)          # out[..., 1:].relu_()
    density = _softplus(out3[:, HID_FEAT:HID_FEAT + 1])     # density_activ(out[..., 0])
    # TODO(synk): density_reg (torch.randn_like noise) is skipped (density_reg=None path).

    # --- rgb MLP: cat([hidden, view_enc]) @ W as ONE K=80 matmul ---
    cat_rgb = jnp.concatenate([hidden.astype(MXU_DTYPE), vb], axis=-1)    # (TM, 80)
    h = jnp.dot(cat_rgb, w_ref[RW0_OFF:RW0_OFF + HID_FEAT + INV_PAD, 0:HID_RGB],
                preferred_element_type=f32) + b_ref[4:5, 0:HID_RGB]
    h = jnp.maximum(h, 0.0)

    rgb_pre = jnp.dot(h.astype(MXU_DTYPE), w_ref[RW1_OFF:RW1_OFF + HID_RGB, 0:3],
                      preferred_element_type=f32) + b_ref[5:6, 0:3]
    rgb = _sigmoid(rgb_pre)

    # direct slice stores into the packed (TM, 4) output: [rgb(3), density(1)]
    out_ref[:, 0:3] = rgb.astype(out_ref.dtype)
    out_ref[:, 3:4] = density.astype(out_ref.dtype)


def nerf_forward(points_3d, ray_unit, params, tm_max=TM_MAX):
    batch_shape = points_3d.shape[:-1]

    # positional encodings in f32, padded, merged into one bf16 streamed slab
    penc = encode_3d(points_3d).reshape(-1, INPUT_3D_DIM)
    venc = encode_view(ray_unit).reshape(-1, INPUT_VIEW_DIM)
    penc = jnp.pad(penc, ((0, 0), (0, IN3_PAD - INPUT_3D_DIM)))
    venc = jnp.pad(venc, ((0, 0), (0, INV_PAD - INPUT_VIEW_DIM)))
    xin = jnp.concatenate([penc, venc], axis=-1).astype(MXU_DTYPE)      # (N, 48) bf16

    n = xin.shape[0]
    # Row tile: as large as possible, multiple of 16, but capped so the grid has
    # >= 2 steps (both v7x TensorCores stay busy via the "parallel" axis).
    half = -(-n // 2)
    tm = min(tm_max, _round_up(max(half, 1), 16))
    n_pad = _round_up(n, tm)
    if n_pad != n:
        xin = jnp.pad(xin, ((0, n_pad - n), (0, 0)))

    w_slab, b_slab = pack_params(params)

    out = pl.pallas_call(
        _nerf_kernel,
        grid=(n_pad // tm,),
        in_specs=[
            pl.BlockSpec((tm, IN_TOTAL), lambda i: (i, 0)),
            # grid-invariant constant slabs: DMA'd once
            pl.BlockSpec((W_ROWS, W_COLS), lambda i: (0, 0)),
            pl.BlockSpec((8, W_COLS), lambda i: (0, 0)),
        ],
        out_specs=pl.BlockSpec((tm, OUT_PACK), lambda i: (i, 0)),
        out_shape=jax.ShapeDtypeStruct((n_pad, OUT_PACK), jnp.float32),
        compiler_params=pltpu.CompilerParams(
            dimension_semantics=("parallel",),
            vmem_limit_bytes=VMEM_LIMIT_BYTES),
    )(xin, w_slab, b_slab)

    rgb = out[:n, 0:3].reshape(*batch_shape, 3)
    density = out[:n, 3].reshape(*batch_shape)
    return rgb, density


# --------------------------------- main --------------------------------------
if __name__ == "__main__":
    key = jax.random.PRNGKey(0)
    key, kp, kr, kparam = jax.random.split(key, 4)

    # points_3D / ray_unit: [batch, rays, samples, 3]
    points_3d = jax.random.normal(kp, (2, 8, 4, 3), jnp.float32)
    ray = jax.random.normal(kr, (2, 8, 4, 3), jnp.float32)
    ray_unit = ray / jnp.linalg.norm(ray, axis=-1, keepdims=True)

    params = init_params(kparam)

    rgb, density = jax.jit(nerf_forward)(points_3d, ray_unit, params)
    jax.block_until_ready((rgb, density))

    assert rgb.shape == (2, 8, 4, 3), rgb.shape
    assert density.shape == (2, 8, 4), density.shape
    assert bool(jnp.all(jnp.isfinite(rgb))) and bool(jnp.all(jnp.isfinite(density)))
    assert bool(jnp.all(rgb >= 0.0)) and bool(jnp.all(rgb <= 1.0))

    print("KERNEL_OK")
</pallas_src>

<mosaic_0001>
module attributes {stable_mosaic.version = 11 : i64} {
  func.func @_nerf_kernel(%arg0: i32, %arg1: memref<32x48xbf16, #tpu.memory_space<vmem>>, %arg2: memref<368x128xbf16, #tpu.memory_space<vmem>>, %arg3: memref<8x128xf32, #tpu.memory_space<vmem>>, %arg4: memref<32x4xf32, #tpu.memory_space<vmem>>) attributes {dimension_semantics = [#tpu.dimension_semantics<parallel>], iteration_bounds = array<i64: 2>, scalar_prefetch = 0 : i64, scratch_operands = 0 : i64, tpu.core_type = #tpu.core_type<tc>, window_params = [{transform_indices = @transform_0, window_bounds = array<i64: 32, 48>}, {pipeline_mode = #tpu.pipeline_mode<synchronous>, transform_indices = @transform_1, window_bounds = array<i64: 368, 128>}, {pipeline_mode = #tpu.pipeline_mode<synchronous>, transform_indices = @transform_2, window_bounds = array<i64: 8, 128>}, {transform_indices = @transform_3, window_bounds = array<i64: 32, 4>}]} {
    %c0 = arith.constant 0 : index
    %c0_0 = arith.constant 0 : index
    %0 = vector.load %arg1[%c0, %c0_0] : memref<32x48xbf16, #tpu.memory_space<vmem>>, vector<32x32xbf16>
    %c0_1 = arith.constant 0 : index
    %c32 = arith.constant 32 : index
    %1 = vector.load %arg1[%c0_1, %c32] : memref<32x48xbf16, #tpu.memory_space<vmem>>, vector<32x16xbf16>
    %c0_2 = arith.constant 0 : index
    %c0_3 = arith.constant 0 : index
    %2 = vector.load %arg2[%c0_2, %c0_3] : memref<368x128xbf16, #tpu.memory_space<vmem>>, vector<32x64xbf16>
    %cst = arith.constant dense<0.000000e+00> : vector<32x64xf32>
    %3 = tpu.matmul %0, %2, %cst {dimension_numbers = #tpu.dot_dimension_numbers<[1], [0], [0], [1], [0, 0, 1, 1], [], []>} : vector<32x32xbf16>, vector<32x64xbf16>, vector<32x64xf32> -> vector<32x64xf32>
    %c0_4 = arith.constant 0 : index
    %c0_5 = arith.constant 0 : index
    %4 = vector.load %arg3[%c0_4, %c0_5] : memref<8x128xf32, #tpu.memory_space<vmem>>, vector<1x64xf32>
    %5 = vector.broadcast %4 : vector<1x64xf32> to vector<32x64xf32>
    %6 = arith.addf %3, %5 : vector<32x64xf32>
    %cst_6 = arith.constant 0.000000e+00 : f32
    %7 = vector.broadcast %cst_6 : f32 to vector<32x64xf32>
    %8 = arith.maximumf %6, %7 : vector<32x64xf32>
    %9 = arith.truncf %8 : vector<32x64xf32> to vector<32x64xbf16>
    %c32_7 = arith.constant 32 : index
    %c0_8 = arith.constant 0 : index
    %10 = vector.load %arg2[%c32_7, %c0_8] : memref<368x128xbf16, #tpu.memory_space<vmem>>, vector<64x64xbf16>
    %cst_9 = arith.constant dense<0.000000e+00> : vector<32x64xf32>
    %11 = tpu.matmul %9, %10, %cst_9 {dimension_numbers = #tpu.dot_dimension_numbers<[1], [0], [0], [1], [0, 0, 1, 1], [], []>} : vector<32x64xbf16>, vector<64x64xbf16>, vector<32x64xf32> -> vector<32x64xf32>
    %c1 = arith.constant 1 : index
    %c0_10 = arith.constant 0 : index
    %12 = vector.load %arg3[%c1, %c0_10] : memref<8x128xf32, #tpu.memory_space<vmem>>, vector<1x64xf32>
    %13 = vector.broadcast %12 : vector<1x64xf32> to vector<32x64xf32>
    %14 = arith.addf %11, %13 : vector<32x64xf32>
    %cst_11 = arith.constant 0.000000e+00 : f32
    %15 = vector.broadcast %cst_11 : f32 to vector<32x64xf32>
    %16 = arith.maximumf %14, %15 : vector<32x64xf32>
    %17 = arith.truncf %16 : vector<32x64xf32> to vector<32x64xbf16>
    %18 = tpu.concatenate %17, %0 in 1 : vector<32x64xbf16>, vector<32x32xbf16> -> vector<32x96xbf16>
    %c96 = arith.constant 96 : index
    %c0_12 = arith.constant 0 : index
    %19 = vector.load %arg2[%c96, %c0_12] : memref<368x128xbf16, #tpu.memory_space<vmem>>, vector<96x64xbf16>
    %cst_13 = arith.constant dense<0.000000e+00> : vector<32x64xf32>
    %20 = tpu.matmul %18, %19, %cst_13 {dimension_numbers = #tpu.dot_dimension_numbers<[1], [0], [0], [1], [0, 0, 1, 1], [], []>} : vector<32x96xbf16>, vector<96x64xbf16>, vector<32x64xf32> -> vector<32x64xf32>
    %c2 = arith.constant 2 : index
    %c0_14 = arith.constant 0 : index
    %21 = vector.load %arg3[%c2, %c0_14] : memref<8x128xf32, #tpu.memory_space<vmem>>, vector<1x64xf32>
    %22 = vector.broadcast %21 : vector<1x64xf32> to vector<32x64xf32>
    %23 = arith.addf %20, %22 : vector<32x64xf32>
    %cst_15 = arith.constant 0.000000e+00 : f32
    %24 = vector.broadcast %cst_15 : f32 to vector<32x64xf32>
    %25 = arith.maximumf %23, %24 : vector<32x64xf32>
    %26 = arith.truncf %25 : vector<32x64xf32> to vector<32x64xbf16>
    %c192 = arith.constant 192 : index
    %c0_16 = arith.constant 0 : index
    %27 = vector.load %arg2[%c192, %c0_16] : memref<368x128xbf16, #tpu.memory_space<vmem>>, vector<64x65xbf16>
    %cst_17 = arith.constant dense<0.000000e+00> : vector<32x65xf32>
    %28 = tpu.matmul %26, %27, %cst_17 {dimension_numbers = #tpu.dot_dimension_numbers<[1], [0], [0], [1], [0, 0, 1, 1], [], []>} : vector<32x64xbf16>, vector<64x65xbf16>, vector<32x65xf32> -> vector<32x65xf32>
    %c3 = arith.constant 3 : index
    %c0_18 = arith.constant 0 : index
    %29 = vector.load %arg3[%c3, %c0_18] : memref<8x128xf32, #tpu.memory_space<vmem>>, vector<1x65xf32>
    %30 = vector.broadcast %29 : vector<1x65xf32> to vector<32x65xf32>
    %31 = arith.addf %28, %30 : vector<32x65xf32>
    %32 = vector.extract_strided_slice %31 {offsets = [0, 0], sizes = [32, 64], strides = [1, 1]} : vector<32x65xf32> to vector<32x64xf32>
    %cst_19 = arith.constant 0.000000e+00 : f32
    %33 = vector.broadcast %cst_19 : f32 to vector<32x64xf32>
    %34 = arith.maximumf %32, %33 : vector<32x64xf32>
    %35 = vector.extract_strided_slice %31 {offsets = [0, 64], sizes = [32, 1], strides = [1, 1]} : vector<32x65xf32> to vector<32x1xf32>
    %cst_20 = arith.constant 0.000000e+00 : f32
    %36 = vector.broadcast %cst_20 : f32 to vector<32x1xf32>
    %37 = arith.maximumf %35, %36 : vector<32x1xf32>
    %38 = math.absf %35 : vector<32x1xf32>
    %cst_21 = arith.constant 0.000000e+00 : f32
    %39 = vector.broadcast %cst_21 : f32 to vector<32x1xf32>
    %40 = arith.subf %39, %38 : vector<32x1xf32>
    %41 = math.exp %40 : vector<32x1xf32>
    %42 = math.log1p %41 : vector<32x1xf32>
    %43 = arith.addf %37, %42 : vector<32x1xf32>
    %44 = arith.truncf %34 : vector<32x64xf32> to vector<32x64xbf16>
    %45 = tpu.concatenate %44, %1 in 1 : vector<32x64xbf16>, vector<32x16xbf16> -> vector<32x80xbf16>
    %c256 = arith.constant 256 : index
    %c0_22 = arith.constant 0 : index
    %46 = vector.load %arg2[%c256, %c0_22] : memref<368x128xbf16, #tpu.memory_space<vmem>>, vector<80x32xbf16>
    %cst_23 = arith.constant dense<0.000000e+00> : vector<32x32xf32>
    %47 = tpu.matmul %45, %46, %cst_23 {dimension_numbers = #tpu.dot_dimension_numbers<[1], [0], [0], [1], [0, 0, 1, 1], [], []>} : vector<32x80xbf16>, vector<80x32xbf16>, vector<32x32xf32> -> vector<32x32xf32>
    %c4 = arith.constant 4 : index
    %c0_24 = arith.constant 0 : index
    %48 = vector.load %arg3[%c4, %c0_24] : memref<8x128xf32, #tpu.memory_space<vmem>>, vector<1x32xf32>
    %49 = vector.broadcast %48 : vector<1x32xf32> to vector<32x32xf32>
    %50 = arith.addf %47, %49 : vector<32x32xf32>
    %cst_25 = arith.constant 0.000000e+00 : f32
    %51 = vector.broadcast %cst_25 : f32 to vector<32x32xf32>
    %52 = arith.maximumf %50, %51 : vector<32x32xf32>
    %53 = arith.truncf %52 : vector<32x32xf32> to vector<32x32xbf16>
    %c336 = arith.constant 336 : index
    %c0_26 = arith.constant 0 : index
    %54 = vector.load %arg2[%c336, %c0_26] : memref<368x128xbf16, #tpu.memory_space<vmem>>, vector<32x3xbf16>
    %cst_27 = arith.constant dense<0.000000e+00> : vector<32x3xf32>
    %55 = tpu.matmul %53, %54, %cst_27 {dimension_numbers = #tpu.dot_dimension_numbers<[1], [0], [0], [1], [0, 0, 1, 1], [], []>} : vector<32x32xbf16>, vector<32x3xbf16>, vector<32x3xf32> -> vector<32x3xf32>
    %c5 = arith.constant 5 : index
    %c0_28 = arith.constant 0 : index
    %56 = vector.load %arg3[%c5, %c0_28] : memref<8x128xf32, #tpu.memory_space<vmem>>, vector<1x3xf32>
    %57 = vector.broadcast %56 : vector<1x3xf32> to vector<32x3xf32>
    %58 = arith.addf %55, %57 : vector<32x3xf32>
    %cst_29 = arith.constant 0.000000e+00 : f32
    %59 = vector.broadcast %cst_29 : f32 to vector<32x3xf32>
    %60 = arith.subf %59, %58 : vector<32x3xf32>
    %61 = math.exp %60 : vector<32x3xf32>
    %cst_30 = arith.constant 1.000000e+00 : f32
    %62 = vector.broadcast %cst_30 : f32 to vector<32x3xf32>
    %63 = arith.addf %62, %61 : vector<32x3xf32>
    %cst_31 = arith.constant 1.000000e+00 : f32
    %64 = vector.broadcast %cst_31 : f32 to vector<32x3xf32>
    %65 = arith.divf %64, %63 : vector<32x3xf32>
    %c0_32 = arith.constant 0 : index
    %c0_33 = arith.constant 0 : index
    %66 = vector.load %arg4[%c0_32, %c0_33] : memref<32x4xf32, #tpu.memory_space<vmem>>, vector<32x3xf32>
    tpu.vector_store %arg4[%c0_32, %c0_33], %65 {strides = array<i32>} : memref<32x4xf32, #tpu.memory_space<vmem>>, vector<32x3xf32>,
    %c0_34 = arith.constant 0 : index
    %c3_35 = arith.constant 3 : index
    %67 = vector.load %arg4[%c0_34, %c3_35] : memref<32x4xf32, #tpu.memory_space<vmem>>, vector<32x1xf32>
    tpu.vector_store %arg4[%c0_34, %c3_35], %43 {strides = array<i32>} : memref<32x4xf32, #tpu.memory_space<vmem>>, vector<32x1xf32>,
    return
  }
  func.func @transform_0(%arg0: i32) -> (i32, i32) {
    %c0_i32 = arith.constant 0 : i32
    %c0_i32_0 = arith.constant 0 : i32
    return %arg0, %c0_i32 : i32, i32
  }
  func.func @transform_1(%arg0: i32) -> (i32, i32) {
    %c0_i32 = arith.constant 0 : i32
    %c0_i32_0 = arith.constant 0 : i32
    %c0_i32_1 = arith.constant 0 : i32
    return %c0_i32, %c0_i32_0 : i32, i32
  }
  func.func @transform_2(%arg0: i32) -> (i32, i32) {
    %c0_i32 = arith.constant 0 : i32
    %c0_i32_0 = arith.constant 0 : i32
    %c0_i32_1 = arith.constant 0 : i32
    return %c0_i32, %c0_i32_0 : i32, i32
  }
  func.func @transform_3(%arg0: i32) -> (i32, i32) {
    %c0_i32 = arith.constant 0 : i32
    %c0_i32_0 = arith.constant 0 : i32
    return %arg0, %c0_i32 : i32, i32
  }
}

</mosaic_0001>

<llo_original>
// kernel: squeeze.1
$region0: #{squeeze.1}
  %s0 = inlined_call_operand.vmem [shape: f32[64], index: 0, kind: input, shape index: {}]
  %s1 = inlined_call_operand.vmem [shape: f32[2,8,4], index: 1, kind: output, shape index: {}]
  $region1: #{squeeze.1} parent=0
    #allocation0 [shape = 'u8[4096]{0}', space=vmem, size = 0x1000, scoped, tag = 'scoped mem for input reshape']
    %s3 = sshllo.u32 0, 1
    %v4 = vld [vmem:[%s0] sm:%s3]
    %5 = vst [vmem:[#allocation0] sm:%s3] %v4
    %v6 = vld [vmem:[#allocation0] sm:$0x1]
    %vm7 = vcmask 31744
    %8 = vst.msk [vmem:[%s1] sm:$0x1] %vm7, %v6
    %v9 = vld [vmem:[#allocation0] sm:$0x1]
    %10 = vrot.lane.b32.xlu0 %v9, 124
    %v11 = vpop.permute.xlu0 %10
    %vm12 = vcmask 31744
    %s13 = scalar_lea.vmem %s1, 1
    %14 = vst.msk [vmem:[%s13] sm:$0x1] %vm12, %v11
    %v15 = vld [vmem:[#allocation0] sm:$0x1]
    %16 = vrot.lane.b32.xlu0 %v15, 120
    %v17 = vpop.permute.xlu0 %16
    %vm18 = vcmask 31744
    %s19 = scalar_lea.vmem %s1, 2
    %20 = vst.msk [vmem:[%s19] sm:$0x1] %vm18, %v17
    %v21 = vld [vmem:[#allocation0] sm:$0x1]
    %22 = vrot.lane.b32.xlu0 %v21, 116
    %v23 = vpop.permute.xlu0 %22
    %vm24 = vcmask 31744
    %s25 = scalar_lea.vmem %s1, 3
    %26 = vst.msk [vmem:[%s25] sm:$0x1] %vm24, %v23
    %v27 = vld [vmem:[#allocation0] sm:$0x1]
    %28 = vrot.lane.b32.xlu0 %v27, 112
    %v29 = vpop.permute.xlu0 %28
    %vm30 = vcmask 31744
    %s31 = scalar_lea.vmem %s1, 4
    %32 = vst.msk [vmem:[%s31] sm:$0x1] %vm30, %v29
    %v33 = vld [vmem:[#allocation0] sm:$0x1]
    %34 = vrot.lane.b32.xlu0 %v33, 108
    %v35 = vpop.permute.xlu0 %34
    %vm36 = vcmask 31744
    %s37 = scalar_lea.vmem %s1, 5
    %38 = vst.msk [vmem:[%s37] sm:$0x1] %vm36, %v35
    %v39 = vld [vmem:[#allocation0] sm:$0x1]
    %40 = vrot.lane.b32.xlu0 %v39, 104
    %v41 = vpop.permute.xlu0 %40
    %vm42 = vcmask 31744
    %s43 = scalar_lea.vmem %s1, 6
    %44 = vst.msk [vmem:[%s43] sm:$0x1] %vm42, %v41
    %v45 = vld [vmem:[#allocation0] sm:$0x1]
    %46 = vrot.lane.b32.xlu0 %v45, 100
    %v47 = vpop.permute.xlu0 %46
    %vm48 = vcmask 31744
    %s49 = scalar_lea.vmem %s1, 7
    %50 = vst.msk [vmem:[%s49] sm:$0x1] %vm48, %v47
    %v51 = vld [vmem:[#allocation0] sm:$0x1]
    %52 = vrot.lane.b32.xlu0 %v51, 96
    %v53 = vpop.permute.xlu0 %52
    %vm54 = vcmask 31744
    %s55 = scalar_lea.vmem %s1, 8
    %56 = vst.msk [vmem:[%s55] sm:$0x1] %vm54, %v53
    %v57 = vld [vmem:[#allocation0] sm:$0x1]
    %58 = vrot.lane.b32.xlu0 %v57, 92
    %v59 = vpop.permute.xlu0 %58
    %vm60 = vcmask 31744
    %s61 = scalar_lea.vmem %s1, 9
    %62 = vst.msk [vmem:[%s61] sm:$0x1] %vm60, %v59
    %v63 = vld [vmem:[#allocation0] sm:$0x1]
    %64 = vrot.lane.b32.xlu0 %v63, 88
    %v65 = vpop.permute.xlu0 %64
    %vm66 = vcmask 31744
    %s67 = scalar_lea.vmem %s1, 10
    %68 = vst.msk [vmem:[%s67] sm:$0x1] %vm66, %v65
    %v69 = vld [vmem:[#allocation0] sm:$0x1]
    %70 = vrot.lane.b32.xlu0 %v69, 84
    %v71 = vpop.permute.xlu0 %70
    %vm72 = vcmask 31744
    %s73 = scalar_lea.vmem %s1, 11
    %74 = vst.msk [vmem:[%s73] sm:$0x1] %vm72, %v71
    %v75 = vld [vmem:[#allocation0] sm:$0x1]
    %76 = vrot.lane.b32.xlu0 %v75, 80
    %v77 = vpop.permute.xlu0 %76
    %vm78 = vcmask 31744
    %s79 = scalar_lea.vmem %s1, 12
    %80 = vst.msk [vmem:[%s79] sm:$0x1] %vm78, %v77
    %v81 = vld [vmem:[#allocation0] sm:$0x1]
    %82 = vrot.lane.b32.xlu0 %v81, 76
    %v83 = vpop.permute.xlu0 %82
    %vm84 = vcmask 31744
    %s85 = scalar_lea.vmem %s1, 13
    %86 = vst.msk [vmem:[%s85] sm:$0x1] %vm84, %v83
    %v87 = vld [vmem:[#allocation0] sm:$0x1]
    %88 = vrot.lane.b32.xlu0 %v87, 72
    %v89 = vpop.permute.xlu0 %88
    %vm90 = vcmask 31744
    %s91 = scalar_lea.vmem %s1, 14
    %92 = vst.msk [vmem:[%s91] sm:$0x1] %vm90, %v89
    %v93 = vld [vmem:[#allocation0] sm:$0x1]
    %94 = vrot.lane.b32.xlu0 %v93, 68
    %v95 = vpop.permute.xlu0 %94
    %vm96 = vcmask 31744
    %s97 = scalar_lea.vmem %s1, 15
    %98 = vst.msk [vmem:[%s97] sm:$0x1] %vm96, %v95

// kernel: nerf_forward.1
$region0: #{nerf_forward.1}
  #allocation0 [shape = 'u32[]', space=smem, size = 0x4, offset = 0x4, fixed_abs, tag = 'smem constant byte address 0x4 - core index']
  #allocation1 [shape = 'u32[144,128]{1,0:T(1,128)}', space=vmem, size = 0x12000, scoped, tag = 'internal scratch']
  %s0 = inlined_call_operand.vmem [shape: bf16[64,48], index: 0, kind: input, shape index: {}]
  %s1 = inlined_call_operand.vmem [shape: bf16[368,128], index: 1, kind: input, shape index: {}]
  %s2 = inlined_call_operand.vmem [shape: f32[8,128], index: 2, kind: input, shape index: {}]
  %s3 = inlined_call_operand.vmem [shape: f32[64,4], index: 3, kind: output, shape index: {}]
  %s4 = sld [smem:[#allocation0]]
  $region45: #{nerf_forward.1} parent=0
    _
  %s6 = ssub.s32 1, %s4
  %s7 = scalar_select 0, %s6, %s4
  loop: start=0, step=1, limit=4
  $region2: #{nerf_forward.1} parent=0 // loop_pre_header
    _
  $region3: #{nerf_forward.1} parent=0 // loop_header
    %s9 = sphi 0, %s13
    %p10 = scmp.ge.s32.totalorder %s9, 4
    %s19 = sphi 0, %s21
    %s22 = sphi 0, %s19
    %s23 = sphi 0, %s22
    %s39 = sphi 0, %s23
    %s43 = sphi 0, %s43
    %s45 = sphi 0, %s43
    %s46 = sphi 0, %s45
    %s60 = sphi 0, %s46
    %s64 = sphi 0, %s64
    %s66 = sphi 0, %s64
    %s67 = sphi 0, %s66
    %s81 = sphi 0, %s67
    %s87 = sphi 0, %s89
    %s90 = sphi 0, %s87
    %s91 = sphi 0, %s90
    %s107 = sphi 0, %s91
  $region4: #{nerf_forward.1} parent=0 // loop_header_branch
    %12 = sbr.rel (%p10) target = $region8
  $region5: #{nerf_forward.1} parent=0 // loop_body
    %s14 = ssub.s32 %s9, 1
    %s15 = ssub.s32 %s9, 2
    %s16 = sadd.s32 %s9, 1
    %s17 = ssub.s32 %s9, %s16
    %p18 = scmp.eq.s32.totalorder %s17, 0
    %s20 = sadd.s32 %s19, 1
    %s21 = scalar_select %p18, %s19, %s20
    %p24 = pneg %p18
    %p25 = scmp.eq.s32.totalorder %s9, 1
    %p26 = por %p24, %p25
    %p27 = scmp.ne.s32.totalorder %s19, %s22
    %p28 = scmp.eq.s32.totalorder %s9, 0
    %p29 = por %p27, %p28
    %p30 = scmp.ne.s32.totalorder %s19, %s22
    %p31 = scmp.eq.s32.totalorder %s14, 1
    %p32 = por %p30, %p31
    %p33 = scmp.ne.s32.totalorder %s22, %s23
    %p34 = scmp.eq.s32.totalorder %s14, 0
    %p35 = por %p33, %p34
    %p36 = scmp.ne.s32.totalorder %s22, %s23
    %p37 = scmp.eq.s32.totalorder %s15, 1
    %p38 = por %p36, %p37
    %p40 = scmp.ne.s32.totalorder %s23, %s39
    %p41 = scmp.eq.s32.totalorder %s15, 0
    %p42 = por %p40, %p41
    %s44 = sadd.s32 %s43, 1
    %p47 = scmp.eq.s32.totalorder %s9, 1
    %p48 = scmp.ne.s32.totalorder %s43, %s45
    %p49 = scmp.eq.s32.totalorder %s9, 0
    %p50 = por %p48, %p49
    %p51 = scmp.ne.s32.totalorder %s43, %s45
    %p52 = scmp.eq.s32.totalorder %s14, 1
    %p53 = por %p51, %p52
    %p54 = scmp.ne.s32.totalorder %s45, %s46
    %p55 = scmp.eq.s32.totalorder %s14, 0
    %p56 = por %p54, %p55
    %p57 = scmp.ne.s32.totalorder %s45, %s46
    %p58 = scmp.eq.s32.totalorder %s15, 1
    %p59 = por %p57, %p58
    %p61 = scmp.ne.s32.totalorder %s46, %s60
    %p62 = scmp.eq.s32.totalorder %s15, 0
    %p63 = por %p61, %p62
    %s65 = sadd.s32 %s64, 1
    %p68 = scmp.eq.s32.totalorder %s9, 1
    %p69 = scmp.ne.s32.totalorder %s64, %s66
    %p70 = scmp.eq.s32.totalorder %s9, 0
    %p71 = por %p69, %p70
    %p72 = scmp.ne.s32.totalorder %s64, %s66
    %p73 = scmp.eq.s32.totalorder %s14, 1
    %p74 = por %p72, %p73
    %p75 = scmp.ne.s32.totalorder %s66, %s67
    %p76 = scmp.eq.s32.totalorder %s14, 0
    %p77 = por %p75, %p76
    %p78 = scmp.ne.s32.totalorder %s66, %s67
    %p79 = scmp.eq.s32.totalorder %s15, 1
    %p80 = por %p78, %p79
    %p82 = scmp.ne.s32.totalorder %s67, %s81
    %p83 = scmp.eq.s32.totalorder %s15, 0
    %p84 = por %p82, %p83
    %s85 = ssub.s32 %s9, %s16
    %p86 = scmp.eq.s32.totalorder %s85, 0
    %s88 = sadd.s32 %s87, 1
    %s89 = scalar_select %p86, %s87, %s88
    %p92 = pneg %p86
    %p93 = scmp.eq.s32.totalorder %s9, 1
    %p94 = por %p92, %p93
    %p95 = scmp.ne.s32.totalorder %s87, %s90
    %p96 = scmp.eq.s32.totalorder %s9, 0
    %p97 = por %p95, %p96
    %p98 = scmp.ne.s32.totalorder %s87, %s90
    %p99 = scmp.eq.s32.totalorder %s14, 1
    %p100 = por %p98, %p99
    %p101 = scmp.ne.s32.totalorder %s90, %s91
    %p102 = scmp.eq.s32.totalorder %s14, 0
    %p103 = por %p101, %p102
    %p104 = scmp.ne.s32.totalorder %s90, %s91
    %p105 = scmp.eq.s32.totalorder %s15, 1
    %p106 = por %p104, %p105
    %p108 = scmp.ne.s32.totalorder %s91, %s107
    %p109 = scmp.eq.s32.totalorder %s15, 0
    %p110 = por %p108, %p109
    %p111 = scmp.le.s32.totalorder 1, %s9
    %p112 = scmp.lt.s32.totalorder %s9, 3
    %p113 = pnand %p111, %p112
    %p114 = pneg %p113
    // Predicated region
    $region9: #{nerf_forward.1} parent=5 // pred_check
      _
    $region10: #{nerf_forward.1} parent=5 // pred_check_branch
      %116 = sbr.rel (%p113) target = $region12
    $region11: #{nerf_forward.1} parent=5 // pred_region
      %s117 = ssub.s32 %s9, 1
      // Predicated region
      $region13: #{nerf_forward.1} parent=11 // pred_check
        %p118 = pneg %p56
      $region14: #{nerf_forward.1} parent=11 // pred_check_branch
        %120 = sbr.rel (%p118) target = $region16
      $region15: #{nerf_forward.1} parent=11 // pred_region
        _
      $region16: #{nerf_forward.1} parent=11 // pred_fallthru
        _
      // Predicated region
      $region17: #{nerf_forward.1} parent=11 // pred_check
        %p121 = pneg %p77
      $region18: #{nerf_forward.1} parent=11 // pred_check_branch
        %123 = sbr.rel (%p121) target = $region20
      $region19: #{nerf_forward.1} parent=11 // pred_region
        _
      $region20: #{nerf_forward.1} parent=11 // pred_fallthru
        _
    $region12: #{nerf_forward.1} parent=5 // pred_fallthru
      _
    %p124 = scmp.lt.s32.totalorder %s9, 2
    // Predicated region
    $region21: #{nerf_forward.1} parent=5 // pred_check
      %p125 = pneg %p124
    $region22: #{nerf_forward.1} parent=5 // pred_check_branch
      %127 = sbr.rel (%p125) target = $region24
    $region23: #{nerf_forward.1} parent=5 // pred_region
      // Predicated region
      $region25: #{nerf_forward.1} parent=23 // pred_check
        %p128 = pneg %p29
      $region26: #{nerf_forward.1} parent=23 // pred_check_branch
        %130 = sbr.rel (%p128) target = $region28
      $region27: #{nerf_forward.1} parent=23 // pred_region
        %s131 = smul.u32 4, %s9
        %p132 = scmp.lt.s32.totalorder %s131, 7
        %s133 = scalar_select %p132, %s131, 7
        %s134 = smul.addr %s133, 4
        %s135 = scalar_lea.vmem %s0, %s134
        %s136 = smul.u32 4, %s9
      $region28: #{nerf_forward.1} parent=23 // pred_fallthru
        _
    $region24: #{nerf_forward.1} parent=5 // pred_fallthru
      _
    %p137 = scmp.le.s32.totalorder 1, %s9
    %p138 = scmp.lt.s32.totalorder %s9, 3
    %p139 = pnand %p137, %p138
    %p140 = pneg %p139
    // Predicated region
    $region29: #{nerf_forward.1} parent=5 // pred_check
      _
    $region30: #{nerf_forward.1} parent=5 // pred_check_branch
      %142 = sbr.rel (%p139) target = $region32
    $region31: #{nerf_forward.1} parent=5 // pred_region
      %s143 = ssub.s32 %s9, 1
      %s144 = smul.u32 4, %s14
      %p145 = scmp.lt.s32.totalorder %s144, 7
      %s146 = scalar_select %p145, %s144, 7
      %s147 = smul.addr %s146, 4
      %s148 = scalar_lea.vmem %s0, %s147
      %p149 = pneg %p35
      %p150 = pneg %p32
      %p151 = pneg %p56
      %p152 = pneg %p53
      %p153 = pneg %p77
      %p154 = pneg %p74
      %p155 = pneg %p103
      %p156 = pneg %p100
      %s157 = smul.u32 4, %s14
      %p158 = scmp.lt.s32.totalorder %s157, 7
      %s159 = scalar_select %p158, %s157, 7
      %s160 = smul.addr %s159, 8
      %s161 = scalar_lea.vmem %s3, %s160
      %s162 = smul.u32 4, %s14
      %p163 = scmp.lt.s32.totalorder %s162, 7
      %s164 = scalar_select %p163, %s162, 7
      %s165 = smul.addr %s164, 4
      %s166 = scalar_lea.vmem %s0, %s165
      %s167 = smul.u32 4, %s14
      %s168 = smul.u32 4, %s14
      %p169 = scmp.lt.s32.totalorder %s168, 7
      %s170 = scalar_select %p169, %s168, 7
      %s171 = smul.addr %s170, 8
      %s172 = scalar_lea.vmem %s3, %s171
      %s173 = smul.u32 4, %s14
      %v175 = vld [vmem:[%s166] sm:$0xf]
      %v176 = vld [vmem:[%s166 + $0x4] sm:$0xf]
      %v177 = vld [vmem:[%s166 + $0x8] sm:$0xf]
      %v178 = vld [vmem:[%s166 + $0xc] sm:$0xf]
      %v179 = vld [vmem:[%s1] sm:$0xf]
      %v180 = vld [vmem:[%s1 + $0x4] sm:$0xf]
      %v181 = vld [vmem:[%s1 + $0x8] sm:$0xf]
      %v182 = vld [vmem:[%s1 + $0xc] sm:$0xf]
      %v183 = vld [vmem:[%s2] sm:$0x1]
      %v184 = vlaneseq
      %v185 = vshrl.u32 %v184, 7
      %v186 = vsub.s32 0, %v185
      %v187 = vrot.slane %v183, %v186
      %v192 = vunpack.c.l.b16 %v175
      %v193 = vunpack.c.l.b16 %v176
      %v194 = vunpack.c.l.b16 %v177
      %v195 = vunpack.c.l.b16 %v178
      %v196 = vpack.c.b16 %v193, %v192
      %v197 = vpack.c.b16 %v195, %v194
      %v202 = vunpack.c.l.b16 %v179
      %v203 = vunpack.c.l.b16 %v180
      %v204 = vunpack.c.l.b16 %v181
      %v205 = vunpack.c.l.b16 %v182
      %v206 = vpack.c.b16 %v203, %v202
      %v207 = vpack.c.b16 %v205, %v204
      %vm210 = vcmask 261120
      %v212 = vsel %vm210, %v196, 0
      %v215 = vsel %vm210, %v197, 0
      %217 = vmatprep.subr.bf16.mxu0 0
      %218 = vmatpush1.bf16.msra.mxu0 %v206
      %219 = vmatprep.subr.bf16.mxu0 0
      %220 = vmatpush1.bf16.msra.mxu0 %v207
      %221 = vmatprep.subr.bf16.mxu0 0
      %222 = vmatpush1.bf16.msra.mxu0 0
      %223 = vmatprep.subr.bf16.mxu0 0
      %224 = vmatpush1.bf16.msra.mxu0 0
      %225 = vmatprep.subr.bf16.mxu0 0
      %226 = vmatpush1.bf16.msra.mxu0 0
      %227 = vmatprep.subr.bf16.mxu0 0
      %228 = vmatpush1.bf16.msra.mxu0 0
      %229 = vmatprep.subr.bf16.mxu0 0
      %230 = vmatpush1.bf16.msra.mxu0 0
      %231 = vmatprep.subr.bf16.mxu0 0
      %232 = vmatpush1.bf16.msra.mxu0 0
      %233 = vmatprep.subr.bf16.mxu0 0
      %234 = vmatpush1.bf16.msra.mxu0 0
      %235 = vmatprep.subr.bf16.mxu0 0
      %236 = vmatpush1.bf16.msra.mxu0 0
      %237 = vmatprep.subr.bf16.mxu0 0
      %238 = vmatpush1.bf16.msra.mxu0 0
      %239 = vmatprep.subr.bf16.mxu0 0
      %240 = vmatpush1.bf16.msra.mxu0 0
      %241 = vmatprep.subr.bf16.mxu0 0
      %242 = vmatpush1.bf16.msra.mxu0 0
      %243 = vmatprep.subr.bf16.mxu0 0
      %244 = vmatpush1.bf16.msra.mxu0 0
      %245 = vmatprep.subr.bf16.mxu0 0
      %246 = vmatpush1.bf16.msra.mxu0 0
      %247 = vmatprep.subr.bf16.mxu0 0
      %248 = vmatpush1.bf16.msra.mxu0 0
      %249 = vmatprep.mubr.bf16.mxu0 0
      %250 = vmatmul.mubr.bf16.gmra.mrb[0].mxu0 %v212
      %v251 = vpop.f32.mrb[0].mxu0
      %v252 = vadd.f32 %v187, %v251
      %v253 = vpop.f32.mrb[0].mxu0
      %v254 = vpop.f32.mrb[0].mxu0
      %v255 = vadd.f32 %v187, %v254
      %v256 = vpop.f32.mrb[0].mxu0
      %257 = vmatprep.mubr.bf16.mxu0 0
      %258 = vmatmul.mubr.bf16.gmra.mrb[0].mxu0 %v215
      %v259 = vpop.f32.mrb[0].mxu0
      %v260 = vadd.f32 %v187, %v259
      %v261 = vpop.f32.mrb[0].mxu0
      %v262 = vpop.f32.mrb[0].mxu0
      %v263 = vadd.f32 %v187, %v262
      %v264 = vpop.f32.mrb[0].mxu0
      %265 = vdwg.mxu0
      %v266 = vmax.f32 %v252, 0.0
      %v267 = vmax.f32 %v255, 0.0
      %v268 = vmax.f32 %v260, 0.0
      %v269 = vmax.f32 %v263, 0.0
      %v270 = vpack.c.bf16 %v267, %v266
      %v271 = vpack.c.bf16 %v269, %v268
      %v272 = vld [vmem:[%s1 + $0x10] sm:$0xf]
      %v273 = vld [vmem:[%s1 + $0x14] sm:$0xf]
      %v274 = vld [vmem:[%s1 + $0x18] sm:$0xf]
      %v275 = vld [vmem:[%s1 + $0x1c] sm:$0xf]
      %v276 = vld [vmem:[%s1 + $0x20] sm:$0xf]
      %v277 = vld [vmem:[%s1 + $0x24] sm:$0xf]
      %v278 = vld [vmem:[%s1 + $0x28] sm:$0xf]
      %v279 = vld [vmem:[%s1 + $0x2c] sm:$0xf]
      %v280 = vld [vmem:[%s2 + $0x1] sm:$0x1]
      %v281 = vlaneseq
      %v282 = vshrl.u32 %v281, 7
      %v283 = vsub.s32 0, %v282
      %v284 = vrot.slane %v280, %v283
      %v293 = vunpack.c.l.b16 %v272
      %v294 = vunpack.c.l.b16 %v273
      %v295 = vunpack.c.l.b16 %v274
      %v296 = vunpack.c.l.b16 %v275
      %v297 = vunpack.c.l.b16 %v276
      %v298 = vunpack.c.l.b16 %v277
      %v299 = vunpack.c.l.b16 %v278
      %v300 = vunpack.c.l.b16 %v279
      %v301 = vpack.c.b16 %v294, %v293
      %v302 = vpack.c.b16 %v296, %v295
      %v303 = vpack.c.b16 %v298, %v297
      %v304 = vpack.c.b16 %v300, %v299
      %vm309 = vcmask 523264
      %v311 = vsel %vm309, %v270, 0
      %v314 = vsel %vm309, %v271, 0
      %316 = vmatprep.subr.bf16.mxu0 0
      %317 = vmatpush1.bf16.msra.mxu0 %v301
      %318 = vmatprep.subr.bf16.mxu0 0
      %319 = vmatpush1.bf16.msra.mxu0 %v302
      %320 = vmatprep.subr.bf16.mxu0 0
      %321 = vmatpush1.bf16.msra.mxu0 %v303
      %322 = vmatprep.subr.bf16.mxu0 0
      %323 = vmatpush1.bf16.msra.mxu0 %v304
      %324 = vmatprep.subr.bf16.mxu0 0
      %325 = vmatpush1.bf16.msra.mxu0 0
      %326 = vmatprep.subr.bf16.mxu0 0
      %327 = vmatpush1.bf16.msra.mxu0 0
      %328 = vmatprep.subr.bf16.mxu0 0
      %329 = vmatpush1.bf16.msra.mxu0 0
      %330 = vmatprep.subr.bf16.mxu0 0
      %331 = vmatpush1.bf16.msra.mxu0 0
      %332 = vmatprep.subr.bf16.mxu0 0
      %333 = vmatpush1.bf16.msra.mxu0 0
      %334 = vmatprep.subr.bf16.mxu0 0
      %335 = vmatpush1.bf16.msra.mxu0 0
      %336 = vmatprep.subr.bf16.mxu0 0
      %337 = vmatpush1.bf16.msra.mxu0 0
      %338 = vmatprep.subr.bf16.mxu0 0
      %339 = vmatpush1.bf16.msra.mxu0 0
      %340 = vmatprep.subr.bf16.mxu0 0
      %341 = vmatpush1.bf16.msra.mxu0 0
      %342 = vmatprep.subr.bf16.mxu0 0
      %343 = vmatpush1.bf16.msra.mxu0 0
      %344 = vmatprep.subr.bf16.mxu0 0
      %345 = vmatpush1.bf16.msra.mxu0 0
      %346 = vmatprep.subr.bf16.mxu0 0
      %347 = vmatpush1.bf16.msra.mxu0 0
      %348 = vmatprep.mubr.bf16.mxu0 0
      %349 = vmatmul.mubr.bf16.gmra.mrb[0].mxu0 %v311
      %v350 = vpop.f32.mrb[0].mxu0
      %v351 = vadd.f32 %v284, %v350
      %v352 = vpop.f32.mrb[0].mxu0
      %v353 = vpop.f32.mrb[0].mxu0
      %v354 = vadd.f32 %v284, %v353
      %v355 = vpop.f32.mrb[0].mxu0
      %356 = vmatprep.mubr.bf16.mxu0 0
      %357 = vmatmul.mubr.bf16.gmra.mrb[0].mxu0 %v314
      %v358 = vpop.f32.mrb[0].mxu0
      %v359 = vadd.f32 %v284, %v358
      %v360 = vpop.f32.mrb[0].mxu0
      %v361 = vpop.f32.mrb[0].mxu0
      %v362 = vadd.f32 %v284, %v361
      %v363 = vpop.f32.mrb[0].mxu0
      %364 = vdwg.mxu0
      %v365 = vmax.f32 %v351, 0.0
      %v366 = vmax.f32 %v354, 0.0
      %v367 = vmax.f32 %v359, 0.0
      %v368 = vmax.f32 %v362, 0.0
      %v369 = vpack.c.bf16 %v366, %v365
      %v370 = vpack.c.bf16 %v368, %v367
      %371 = vrot.lane.b32.xlu0 %v196, 64
      %v372 = vpop.permute.xlu0 %371
      %373 = vrot.lane.b32.xlu0 %v197, 64
      %v374 = vpop.permute.xlu0 %373
      %v377 = vsel %vm309, %v369, %v372
      %v380 = vsel %vm309, %v370, %v374
      %v381 = vld [vmem:[%s1 + $0x30] sm:$0xf]
      %v382 = vld [vmem:[%s1 + $0x34] sm:$0xf]
      %v383 = vld [vmem:[%s1 + $0x38] sm:$0xf]
      %v384 = vld [vmem:[%s1 + $0x3c] sm:$0xf]
      %v385 = vld [vmem:[%s1 + $0x40] sm:$0xf]
      %v386 = vld [vmem:[%s1 + $0x44] sm:$0xf]
      %v387 = vld [vmem:[%s1 + $0x48] sm:$0xf]
      %v388 = vld [vmem:[%s1 + $0x4c] sm:$0xf]
      %v389 = vld [vmem:[%s1 + $0x50] sm:$0xf]
      %v390 = vld [vmem:[%s1 + $0x54] sm:$0xf]
      %v391 = vld [vmem:[%s1 + $0x58] sm:$0xf]
      %v392 = vld [vmem:[%s1 + $0x5c] sm:$0xf]
      %v393 = vld [vmem:[%s2 + $0x2] sm:$0x1]
      %v394 = vlaneseq
      %v395 = vshrl.u32 %v394, 7
      %v396 = vsub.s32 0, %v395
      %v397 = vrot.slane %v393, %v396
      %v410 = vunpack.c.l.b16 %v381
      %v411 = vunpack.c.l.b16 %v382
      %v412 = vunpack.c.l.b16 %v383
      %v413 = vunpack.c.l.b16 %v384
      %v414 = vunpack.c.l.b16 %v385
      %v415 = vunpack.c.l.b16 %v386
      %v416 = vunpack.c.l.b16 %v387
      %v417 = vunpack.c.l.b16 %v388
      %v418 = vunpack.c.l.b16 %v389
      %v419 = vunpack.c.l.b16 %v390
      %v420 = vunpack.c.l.b16 %v391
      %v421 = vunpack.c.l.b16 %v392
      %v422 = vpack.c.b16 %v411, %v410
      %v423 = vpack.c.b16 %v413, %v412
      %v424 = vpack.c.b16 %v415, %v414
      %v425 = vpack.c.b16 %v417, %v416
      %v426 = vpack.c.b16 %v419, %v418
      %v427 = vpack.c.b16 %v421, %v420
      %vm434 = vcmask 785408
      %v435 = vsel %vm434, %v377, 0
      %v437 = vsel %vm434, %v380, 0
      %439 = vmatprep.subr.bf16.mxu0 0
      %440 = vmatpush1.bf16.msra.mxu0 %v422
      %441 = vmatprep.subr.bf16.mxu0 0
      %442 = vmatpush1.bf16.msra.mxu0 %v423
      %443 = vmatprep.subr.bf16.mxu0 0
      %444 = vmatpush1.bf16.msra.mxu0 %v424
      %445 = vmatprep.subr.bf16.mxu0 0
      %446 = vmatpush1.bf16.msra.mxu0 %v425
      %447 = vmatprep.subr.bf16.mxu0 0
      %448 = vmatpush1.bf16.msra.mxu0 %v426
      %449 = vmatprep.subr.bf16.mxu0 0
      %450 = vmatpush1.bf16.msra.mxu0 %v427
      %451 = vmatprep.subr.bf16.mxu0 0
      %452 = vmatpush1.bf16.msra.mxu0 0
      %453 = vmatprep.subr.bf16.mxu0 0
      %454 = vmatpush1.bf16.msra.mxu0 0
      %455 = vmatprep.subr.bf16.mxu0 0
      %456 = vmatpush1.bf16.msra.mxu0 0
      %457 = vmatprep.subr.bf16.mxu0 0
      %458 = vmatpush1.bf16.msra.mxu0 0
      %459 = vmatprep.subr.bf16.mxu0 0
      %460 = vmatpush1.bf16.msra.mxu0 0
      %461 = vmatprep.subr.bf16.mxu0 0
      %462 = vmatpush1.bf16.msra.mxu0 0
      %463 = vmatprep.subr.bf16.mxu0 0
      %464 = vmatpush1.bf16.msra.mxu0 0
      %465 = vmatprep.subr.bf16.mxu0 0
      %466 = vmatpush1.bf16.msra.mxu0 0
      %467 = vmatprep.subr.bf16.mxu0 0
      %468 = vmatpush1.bf16.msra.mxu0 0
      %469 = vmatprep.subr.bf16.mxu0 0
      %470 = vmatpush1.bf16.msra.mxu0 0
      %471 = vmatprep.mubr.bf16.mxu0 0
      %472 = vmatmul.mubr.bf16.gmra.mrb[0].mxu0 %v435
      %v473 = vpop.f32.mrb[0].mxu0
      %v474 = vadd.f32 %v397, %v473
      %v475 = vpop.f32.mrb[0].mxu0
      %v476 = vpop.f32.mrb[0].mxu0
      %v477 = vadd.f32 %v397, %v476
      %v478 = vpop.f32.mrb[0].mxu0
      %479 = vmatprep.mubr.bf16.mxu0 0
      %480 = vmatmul.mubr.bf16.gmra.mrb[0].mxu0 %v437
      %v481 = vpop.f32.mrb[0].mxu0
      %v482 = vadd.f32 %v397, %v481
      %v483 = vpop.f32.mrb[0].mxu0
      %v484 = vpop.f32.mrb[0].mxu0
      %v485 = vadd.f32 %v397, %v484
      %v486 = vpop.f32.mrb[0].mxu0
      %487 = vdwg.mxu0
      %v488 = vmax.f32 %v474, 0.0
      %v489 = vmax.f32 %v477, 0.0
      %v490 = vmax.f32 %v482, 0.0
      %v491 = vmax.f32 %v485, 0.0
      %v492 = vpack.c.bf16 %v489, %v488
      %v493 = vpack.c.bf16 %v491, %v490
      %v494 = vld [vmem:[%s1 + $0x60] sm:$0xf]
      %v495 = vld [vmem:[%s1 + $0x64] sm:$0xf]
      %v496 = vld [vmem:[%s1 + $0x68] sm:$0xf]
      %v497 = vld [vmem:[%s1 + $0x6c] sm:$0xf]
      %v498 = vld [vmem:[%s1 + $0x70] sm:$0xf]
      %v499 = vld [vmem:[%s1 + $0x74] sm:$0xf]
      %v500 = vld [vmem:[%s1 + $0x78] sm:$0xf]
      %v501 = vld [vmem:[%s1 + $0x7c] sm:$0xf]
      %v502 = vld [vmem:[%s2 + $0x3] sm:$0x1]
      %v503 = vlaneseq
      %v504 = vshrl.u32 %v503, 7
      %v505 = vsub.s32 0, %v504
      %v506 = vrot.slane %v502, %v505
      %v515 = vunpack.c.l.b16 %v494
      %v516 = vunpack.c.l.b16 %v495
      %v517 = vunpack.c.l.b16 %v496
      %v518 = vunpack.c.l.b16 %v497
      %v519 = vunpack.c.l.b16 %v498
      %v520 = vunpack.c.l.b16 %v499
      %v521 = vunpack.c.l.b16 %v500
      %v522 = vunpack.c.l.b16 %v501
      %v523 = vpack.c.b16 %v516, %v515
      %v524 = vpack.c.b16 %v518, %v517
      %v525 = vpack.c.b16 %v520, %v519
      %v526 = vpack.c.b16 %v522, %v521
      %v532 = vsel %vm309, %v492, 0
      %v535 = vsel %vm309, %v493, 0
      %537 = vmatprep.subr.bf16.mxu0 0
      %538 = vmatpush1.bf16.msra.mxu0 %v523
      %539 = vmatprep.subr.bf16.mxu0 0
      %540 = vmatpush1.bf16.msra.mxu0 %v524
      %541 = vmatprep.subr.bf16.mxu0 0
      %542 = vmatpush1.bf16.msra.mxu0 %v525
      %543 = vmatprep.subr.bf16.mxu0 0
      %544 = vmatpush1.bf16.msra.mxu0 %v526
      %545 = vmatprep.subr.bf16.mxu0 0
      %546 = vmatpush1.bf16.msra.mxu0 0
      %547 = vmatprep.subr.bf16.mxu0 0
      %548 = vmatpush1.bf16.msra.mxu0 0
      %549 = vmatprep.subr.bf16.mxu0 0
      %550 = vmatpush1.bf16.msra.mxu0 0
      %551 = vmatprep.subr.bf16.mxu0 0
      %552 = vmatpush1.bf16.msra.mxu0 0
      %553 = vmatprep.subr.bf16.mxu0 0
      %554 = vmatpush1.bf16.msra.mxu0 0
      %555 = vmatprep.subr.bf16.mxu0 0
      %556 = vmatpush1.bf16.msra.mxu0 0
      %557 = vmatprep.subr.bf16.mxu0 0
      %558 = vmatpush1.bf16.msra.mxu0 0
      %559 = vmatprep.subr.bf16.mxu0 0
      %560 = vmatpush1.bf16.msra.mxu0 0
      %561 = vmatprep.subr.bf16.mxu0 0
      %562 = vmatpush1.bf16.msra.mxu0 0
      %563 = vmatprep.subr.bf16.mxu0 0
      %564 = vmatpush1.bf16.msra.mxu0 0
      %565 = vmatprep.subr.bf16.mxu0 0
      %566 = vmatpush1.bf16.msra.mxu0 0
      %567 = vmatprep.subr.bf16.mxu0 0
      %568 = vmatpush1.bf16.msra.mxu0 0
      %569 = vmatprep.mubr.bf16.mxu0 0
      %570 = vmatmul.mubr.bf16.gmra.mrb[0].mxu0 %v532
      %v571 = vpop.f32.mrb[0].mxu0
      %v572 = vadd.f32 %v506, %v571
      %v573 = vpop.f32.mrb[0].mxu0
      %v574 = vpop.f32.mrb[0].mxu0
      %v575 = vadd.f32 %v506, %v574
      %v576 = vpop.f32.mrb[0].mxu0
      %577 = vmatprep.mubr.bf16.mxu0 0
      %578 = vmatmul.mubr.bf16.gmra.mrb[0].mxu0 %v535
      %v579 = vpop.f32.mrb[0].mxu0
      %v580 = vadd.f32 %v506, %v579
      %v581 = vpop.f32.mrb[0].mxu0
      %v582 = vpop.f32.mrb[0].mxu0
      %v583 = vadd.f32 %v506, %v582
      %v584 = vpop.f32.mrb[0].mxu0
      %585 = vdwg.mxu0
      %v586 = vmax.f32 %v572, 0.0
      %v587 = vmax.f32 %v575, 0.0
      %v588 = vmax.f32 %v580, 0.0
      %v589 = vmax.f32 %v583, 0.0
      %v590 = vand.u32 2147483647, %v572
      %v591 = vand.u32 2147483647, %v575
      %v592 = vand.u32 2147483647, %v580
      %v593 = vand.u32 2147483647, %v583
      %v594 = vsub.f32 0.0, %v590
      %v595 = vsub.f32 0.0, %v591
      %v596 = vsub.f32 0.0, %v592
      %v597 = vsub.f32 0.0, %v593
      %v598 = vmul.f32 %v594, 1.442695
      %v599 = vpow.pop %v598
      %v600 = vmul.f32 %v595, 1.442695
      %v601 = vpow.pop %v600
      %v602 = vmul.f32 %v596, 1.442695
      %v603 = vpow.pop %v602
      %v604 = vmul.f32 %v597, 1.442695
      %v605 = vpow.pop %v604
      %v606 = vadd.f32 %v599, 1.0
      %v607 = vlog2.pop %v606
      %v608 = vmul.f32 %v607, 0.6931472
      %v609 = vmul.f32 -0.5, %v599
      %v610 = vadd.f32 %v609, 1.0
      %v611 = vmul.f32 %v610, %v599
      %v612 = vand.u32 2147483647, %v599
      %vm613 = vcmp.lt.f32.partialorder %v612, 0.0004427343
      %v614 = vsel %vm613, %v611, %v608
      %v615 = vadd.f32 %v601, 1.0
      %v616 = vlog2.pop %v615
      %v617 = vmul.f32 %v616, 0.6931472
      %v618 = vmul.f32 -0.5, %v601
      %v619 = vadd.f32 %v618, 1.0
      %v620 = vmul.f32 %v619, %v601
      %v621 = vand.u32 2147483647, %v601
      %vm622 = vcmp.lt.f32.partialorder %v621, 0.0004427343
      %v623 = vsel %vm622, %v620, %v617
      %v624 = vadd.f32 %v603, 1.0
      %v625 = vlog2.pop %v624
      %v626 = vmul.f32 %v625, 0.6931472
      %v627 = vmul.f32 -0.5, %v603
      %v628 = vadd.f32 %v627, 1.0
      %v629 = vmul.f32 %v628, %v603
      %v630 = vand.u32 2147483647, %v603
      %vm631 = vcmp.lt.f32.partialorder %v630, 0.0004427343
      %v632 = vsel %vm631, %v629, %v626
      %v633 = vadd.f32 %v605, 1.0
      %v634 = vlog2.pop %v633
      %v635 = vmul.f32 %v634, 0.6931472
      %v636 = vmul.f32 -0.5, %v605
      %v637 = vadd.f32 %v636, 1.0
      %v638 = vmul.f32 %v637, %v605
      %v639 = vand.u32 2147483647, %v605
      %vm640 = vcmp.lt.f32.partialorder %v639, 0.0004427343
      %v641 = vsel %vm640, %v638, %v635
      %v642 = vadd.f32 %v586, %v614
      %v643 = vadd.f32 %v587, %v623
      %v644 = vadd.f32 %v588, %v632
      %v645 = vadd.f32 %v589, %v641
      %v646 = vpack.c.bf16 %v587, %v586
      %v647 = vpack.c.bf16 %v589, %v588
      %648 = vrot.lane.b32.xlu0 %v196, 32
      %v649 = vpop.permute.xlu0 %648
      %650 = vrot.lane.b32.xlu0 %v197, 32
      %v651 = vpop.permute.xlu0 %650
      %v654 = vsel %vm309, %v646, %v649
      %v657 = vsel %vm309, %v647, %v651
      %v658 = vld [vmem:[%s1 + $0x80] sm:$0xf]
      %v659 = vld [vmem:[%s1 + $0x84] sm:$0xf]
      %v660 = vld [vmem:[%s1 + $0x88] sm:$0xf]
      %v661 = vld [vmem:[%s1 + $0x8c] sm:$0xf]
      %v662 = vld [vmem:[%s1 + $0x90] sm:$0xf]
      %v663 = vld [vmem:[%s1 + $0x94] sm:$0xf]
      %v664 = vld [vmem:[%s1 + $0x98] sm:$0xf]
      %v665 = vld [vmem:[%s1 + $0x9c] sm:$0xf]
      %v666 = vld [vmem:[%s1 + $0xa0] sm:$0xf]
      %v667 = vld [vmem:[%s1 + $0xa4] sm:$0xf]
      %v668 = vld [vmem:[%s2 + $0x4] sm:$0x1]
      %v669 = vlaneseq
      %v670 = vshrl.u32 %v669, 7
      %v671 = vsub.s32 0, %v670
      %v672 = vrot.slane %v668, %v671
      %v683 = vunpack.c.l.b16 %v658
      %v684 = vunpack.c.l.b16 %v659
      %v685 = vunpack.c.l.b16 %v660
      %v686 = vunpack.c.l.b16 %v661
      %v687 = vunpack.c.l.b16 %v662
      %v688 = vunpack.c.l.b16 %v663
      %v689 = vunpack.c.l.b16 %v664
      %v690 = vunpack.c.l.b16 %v665
      %v691 = vunpack.c.l.b16 %v666
      %v692 = vunpack.c.l.b16 %v667
      %v693 = vpack.c.b16 %v684, %v683
      %v694 = vpack.c.b16 %v686, %v685
      %v695 = vpack.c.b16 %v688, %v687
      %v696 = vpack.c.b16 %v690, %v689
      %v697 = vpack.c.b16 %v692, %v691
      %vm703 = vcmask 654336
      %v704 = vsel %vm703, %v654, 0
      %v706 = vsel %vm703, %v657, 0
      %708 = vmatprep.subr.bf16.mxu0 0
      %709 = vmatpush1.bf16.msra.mxu0 %v693
      %710 = vmatprep.subr.bf16.mxu0 0
      %711 = vmatpush1.bf16.msra.mxu0 %v694
      %712 = vmatprep.subr.bf16.mxu0 0
      %713 = vmatpush1.bf16.msra.mxu0 %v695
      %714 = vmatprep.subr.bf16.mxu0 0
      %715 = vmatpush1.bf16.msra.mxu0 %v696
      %716 = vmatprep.subr.bf16.mxu0 0
      %717 = vmatpush1.bf16.msra.mxu0 %v697
      %718 = vmatprep.subr.bf16.mxu0 0
      %719 = vmatpush1.bf16.msra.mxu0 0
      %720 = vmatprep.subr.bf16.mxu0 0
      %721 = vmatpush1.bf16.msra.mxu0 0
      %722 = vmatprep.subr.bf16.mxu0 0
      %723 = vmatpush1.bf16.msra.mxu0 0
      %724 = vmatprep.subr.bf16.mxu0 0
      %725 = vmatpush1.bf16.msra.mxu0 0
      %726 = vmatprep.subr.bf16.mxu0 0
      %727 = vmatpush1.bf16.msra.mxu0 0
      %728 = vmatprep.subr.bf16.mxu0 0
      %729 = vmatpush1.bf16.msra.mxu0 0
      %730 = vmatprep.subr.bf16.mxu0 0
      %731 = vmatpush1.bf16.msra.mxu0 0
      %732 = vmatprep.subr.bf16.mxu0 0
      %733 = vmatpush1.bf16.msra.mxu0 0
      %734 = vmatprep.subr.bf16.mxu0 0
      %735 = vmatpush1.bf16.msra.mxu0 0
      %736 = vmatprep.subr.bf16.mxu0 0
      %737 = vmatpush1.bf16.msra.mxu0 0
      %738 = vmatprep.subr.bf16.mxu0 0
      %739 = vmatpush1.bf16.msra.mxu0 0
      %740 = vmatprep.mubr.bf16.mxu0 0
      %741 = vmatmul.mubr.bf16.gmra.mrb[0].mxu0 %v704
      %v742 = vpop.f32.mrb[0].mxu0
      %v743 = vadd.f32 %v672, %v742
      %v744 = vpop.f32.mrb[0].mxu0
      %v745 = vpop.f32.mrb[0].mxu0
      %v746 = vadd.f32 %v672, %v745
      %v747 = vpop.f32.mrb[0].mxu0
      %748 = vmatprep.mubr.bf16.mxu0 0
      %749 = vmatmul.mubr.bf16.gmra.mrb[0].mxu0 %v706
      %v750 = vpop.f32.mrb[0].mxu0
      %v751 = vadd.f32 %v672, %v750
      %v752 = vpop.f32.mrb[0].mxu0
      %v753 = vpop.f32.mrb[0].mxu0
      %v754 = vadd.f32 %v672, %v753
      %v755 = vpop.f32.mrb[0].mxu0
      %756 = vdwg.mxu0
      %v757 = vmax.f32 %v743, 0.0
      %v758 = vmax.f32 %v746, 0.0
      %v759 = vmax.f32 %v751, 0.0
      %v760 = vmax.f32 %v754, 0.0
      %v761 = vpack.c.bf16 %v758, %v757
      %v762 = vpack.c.bf16 %v760, %v759
      %v763 = vld [vmem:[%s1 + $0xa8] sm:$0xf]
      %v764 = vld [vmem:[%s1 + $0xac] sm:$0xf]
      %v765 = vld [vmem:[%s1 + $0xb0] sm:$0xf]
      %v766 = vld [vmem:[%s1 + $0xb4] sm:$0xf]
      %v767 = vld [vmem:[%s2 + $0x5] sm:$0x1]
      %v768 = vlaneseq
      %v769 = vshrl.u32 %v768, 7
      %v770 = vsub.s32 0, %v769
      %v771 = vrot.slane %v767, %v770
      %v776 = vunpack.c.l.b16 %v763
      %v777 = vunpack.c.l.b16 %v764
      %v778 = vunpack.c.l.b16 %v765
      %v779 = vunpack.c.l.b16 %v766
      %v780 = vpack.c.b16 %v777, %v776
      %v781 = vpack.c.b16 %v779, %v778
      %v785 = vsel %vm210, %v761, 0
      %v788 = vsel %vm210, %v762, 0
      %790 = vmatprep.subr.bf16.mxu0 0
      %791 = vmatpush1.bf16.msra.mxu0 %v780
      %792 = vmatprep.subr.bf16.mxu0 0
      %793 = vmatpush1.bf16.msra.mxu0 %v781
      %794 = vmatprep.subr.bf16.mxu0 0
      %795 = vmatpush1.bf16.msra.mxu0 0
      %796 = vmatprep.subr.bf16.mxu0 0
      %797 = vmatpush1.bf16.msra.mxu0 0
      %798 = vmatprep.subr.bf16.mxu0 0
      %799 = vmatpush1.bf16.msra.mxu0 0
      %800 = vmatprep.subr.bf16.mxu0 0
      %801 = vmatpush1.bf16.msra.mxu0 0
      %802 = vmatprep.subr.bf16.mxu0 0
      %803 = vmatpush1.bf16.msra.mxu0 0
      %804 = vmatprep.subr.bf16.mxu0 0
      %805 = vmatpush1.bf16.msra.mxu0 0
      %806 = vmatprep.subr.bf16.mxu0 0
      %807 = vmatpush1.bf16.msra.mxu0 0
      %808 = vmatprep.subr.bf16.mxu0 0
      %809 = vmatpush1.bf16.msra.mxu0 0
      %810 = vmatprep.subr.bf16.mxu0 0
      %811 = vmatpush1.bf16.msra.mxu0 0
      %812 = vmatprep.subr.bf16.mxu0 0
      %813 = vmatpush1.bf16.msra.mxu0 0
      %814 = vmatprep.subr.bf16.mxu0 0
      %815 = vmatpush1.bf16.msra.mxu0 0
      %816 = vmatprep.subr.bf16.mxu0 0
      %817 = vmatpush1.bf16.msra.mxu0 0
      %818 = vmatprep.subr.bf16.mxu0 0
      %819 = vmatpush1.bf16.msra.mxu0 0
      %820 = vmatprep.subr.bf16.mxu0 0
      %821 = vmatpush1.bf16.msra.mxu0 0
      %822 = vmatprep.mubr.bf16.mxu0 0
      %823 = vmatmul.mubr.bf16.gmra.mrb[0].mxu0 %v785
      %v824 = vpop.f32.mrb[0].mxu0
      %v825 = vadd.f32 %v771, %v824
      %v826 = vpop.f32.mrb[0].mxu0
      %v827 = vpop.f32.mrb[0].mxu0
      %v828 = vadd.f32 %v771, %v827
      %v829 = vpop.f32.mrb[0].mxu0
      %830 = vmatprep.mubr.bf16.mxu0 0
      %831 = vmatmul.mubr.bf16.gmra.mrb[0].mxu0 %v788
      %v832 = vpop.f32.mrb[0].mxu0
      %v833 = vadd.f32 %v771, %v832
      %v834 = vpop.f32.mrb[0].mxu0
      %v835 = vpop.f32.mrb[0].mxu0
      %v836 = vadd.f32 %v771, %v835
      %v837 = vpop.f32.mrb[0].mxu0
      %838 = vdwg.mxu0
      %v839 = vsub.f32 0.0, %v825
      %v840 = vsub.f32 0.0, %v828
      %v841 = vsub.f32 0.0, %v833
      %v842 = vsub.f32 0.0, %v836
      %v843 = vmul.f32 %v839, 1.442695
      %v844 = vpow.pop %v843
      %v845 = vmul.f32 %v840, 1.442695
      %v846 = vpow.pop %v845
      %v847 = vmul.f32 %v841, 1.442695
      %v848 = vpow.pop %v847
      %v849 = vmul.f32 %v842, 1.442695
      %v850 = vpow.pop %v849
      %v851 = vadd.f32 %v844, 1.0
      %v852 = vadd.f32 %v846, 1.0
      %v853 = vadd.f32 %v848, 1.0
      %v854 = vadd.f32 %v850, 1.0
      %v855 = vrcp.pop %v851
      %v856 = vmul.f32 1.0, %v855
      %v857 = vrcp.pop %v852
      %v858 = vmul.f32 1.0, %v857
      %v859 = vrcp.pop %v853
      %v860 = vmul.f32 1.0, %v859
      %v861 = vrcp.pop %v854
      %v862 = vmul.f32 1.0, %v861
      %vm863 = vcmask 23552
      %864 = vst.msk [vmem:[%s172] sm:$0xff] %vm863, %v856
      %865 = vst.msk [vmem:[%s172 + $0x8] sm:$0xff] %vm863, %v858
      %866 = vst.msk [vmem:[%s172 + $0x10] sm:$0xff] %vm863, %v860
      %867 = vst.msk [vmem:[%s172 + $0x18] sm:$0xff] %vm863, %v862
      %872 = vrot.lane.b32.xlu0 %v642, 67
      %v873 = vpop.permute.xlu0 %872
      %874 = vrot.lane.b32.xlu0 %v643, 67
      %v875 = vpop.permute.xlu0 %874
      %876 = vrot.lane.b32.xlu0 %v644, 67
      %v877 = vpop.permute.xlu0 %876
      %878 = vrot.lane.b32.xlu0 %v645, 67
      %v879 = vpop.permute.xlu0 %878
      %vm884 = vcmask 31768
      %885 = vst.msk [vmem:[%s172] sm:$0xff] %vm884, %v873
      %886 = vst.msk [vmem:[%s172 + $0x8] sm:$0xff] %vm884, %v875
      %887 = vst.msk [vmem:[%s172 + $0x10] sm:$0xff] %vm884, %v877
      %888 = vst.msk [vmem:[%s172 + $0x18] sm:$0xff] %vm884, %v879
      %s889 = smul.u32 4, %s14
      %p890 = scmp.lt.s32.totalorder %s889, 7
      %s891 = scalar_select %p890, %s889, 7
      %s892 = smul.addr %s891, 8
      %s893 = scalar_lea.vmem %s3, %s892
      // Predicated region
      $region33: #{nerf_forward.1} parent=31 // pred_check
        %p894 = pneg %p100
      $region34: #{nerf_forward.1} parent=31 // pred_check_branch
        %896 = sbr.rel (%p894) target = $region36
      $region35: #{nerf_forward.1} parent=31 // pred_region
        %s897 = smul.u32 4, %s14
      $region36: #{nerf_forward.1} parent=31 // pred_fallthru
        _
    $region32: #{nerf_forward.1} parent=5 // pred_fallthru
      _
    %p898 = scmp.le.s32.totalorder 2, %s9
    // Predicated region
    $region37: #{nerf_forward.1} parent=5 // pred_check
      %p899 = pneg %p898
    $region38: #{nerf_forward.1} parent=5 // pred_check_branch
      %901 = sbr.rel (%p899) target = $region40
    $region39: #{nerf_forward.1} parent=5 // pred_region
      %s902 = ssub.s32 %s9, 2
      // Predicated region
      $region41: #{nerf_forward.1} parent=39 // pred_check
        %p903 = pneg %p106
      $region42: #{nerf_forward.1} parent=39 // pred_check_branch
        %905 = sbr.rel (%p903) target = $region44
      $region43: #{nerf_forward.1} parent=39 // pred_region
        %s906 = smul.u32 4, %s15
        %p907 = scmp.lt.s32.totalorder %s906, 7
        %s908 = scalar_select %p907, %s906, 7
        %s909 = smul.addr %s908, 8
        %s910 = scalar_lea.vmem %s3, %s909
      $region44: #{nerf_forward.1} parent=39 // pred_fallthru
        _
    $region40: #{nerf_forward.1} parent=5 // pred_fallthru
      _
  $region6: #{nerf_forward.1} parent=0 // loop_footer
    %s13 = sadd.s32 1, %s9
  $region7: #{nerf_forward.1} parent=0 // loop_footer_branch
    %8 = sbr.rel target = $region3
  $region8: #{nerf_forward.1} parent=0 // loop_exit
    _

</llo_original>
